<compile_context>
chip_gen: v7x
topology: tpu7x:2x2x1
jax: 0.10.0
libtpu: 0.0.40
codegen_flags: <defaults>
</compile_context>

<pallas_src>
import functools

import jax
import jax.numpy as jnp
from jax.experimental import pallas as pl
from jax.experimental.pallas import tpu as pltpu

LOG_STD_MIN = -20.0
LOG_STD_MAX = 2.0


def _round_up(x, m):
    return ((x + m - 1) // m) * m


def gaussian_policy_kernel(obs_ref,
                           w1_ref, b1_ref,
                           w2_ref, b2_ref,
                           wh_ref, bh_ref,
                           out_ref,
                           *, act_dim):
    """One batch tile: obs [TB, obs_dim] -> fused [TB, 2*act_dim] = [mean | std]."""
    x = obs_ref[...]

    # hidden layer 1: Linear + ReLU (f32 matmul, f32 accumulate).
    h = jnp.dot(x, w1_ref[...], preferred_element_type=jnp.float32) + b1_ref[...]
    h = jnp.maximum(h, 0.0)

    # hidden layer 2: Linear + ReLU (mlp output_activation is ReLU here).
    h = jnp.dot(h, w2_ref[...], preferred_element_type=jnp.float32) + b2_ref[...]
    h = jnp.maximum(h, 0.0)

    # fused heads: one matmul produces [mean | log_std] on 2*act_dim lanes.
    y = jnp.dot(h, wh_ref[...], preferred_element_type=jnp.float32) + bh_ref[...]

    # lanes [0, act_dim)          -> mean (identity)
    # lanes [act_dim, 2*act_dim)  -> std = exp(clip(log_std, -20, 2))
    # (1, 2*act_dim) mask row broadcasts over the batch tile (no full-tile iota).
    lane = jax.lax.broadcasted_iota(jnp.int32, (1, 2 * act_dim), dimension=1)
    std = jnp.exp(jnp.clip(y, LOG_STD_MIN, LOG_STD_MAX))
    out_ref[...] = jnp.where(lane < act_dim, y, std).astype(out_ref.dtype)


def prepare_kernel_params(params, act_dim):
    """One-time prep: fuse mean & log_std heads into one [h2, 2*act_dim] matmul.

    Everything stays f32 (no bf16 casts): the kernel is DMA/overhead bound and
    f32 matmuls keep near-exact parity with the PyTorch reference."""
    wh = jnp.concatenate([params["wm"], params["ws"]], axis=1)   # [h2, 2*act_dim]
    bh = jnp.concatenate([params["bm"], params["bs"]], axis=1)   # [1,  2*act_dim]
    return {
        "w1": params["w1"], "b1": params["b1"],
        "w2": params["w2"], "b2": params["b2"],
        "wh": wh, "bh": bh,
        "act_dim": act_dim,
    }


def gaussian_policy_forward(obs, kp, *, batch_tile=4096):
    """obs: [B, obs_dim] float32. kp: output of prepare_kernel_params."""
    B, obs_dim = obs.shape
    act_dim = kp["act_dim"]
    out_dim = 2 * act_dim

    # Batch tiling: TB multiple of 8; grid = cdiv(B, TB) so Pallas masks the
    # ragged last block itself (no wrapper-side jnp.pad HBM copy -- padded rows
    # are computed on but never written back; clip bounds exp on garbage).
    # Large TB amortizes the ~0.35us/step grid overhead; VMEM is not a
    # constraint (obs + out tiles at TB=4096 are ~0.5 MiB double-buffered).
    tb = min(batch_tile, _round_up(max(B, 1), 8))
    # v7x megacore: when there is enough work (>= ~512 rows per core), cap TB
    # so the "parallel" batch axis has >= 2 grid steps and both TCs get work.
    if B >= 1024:
        tb = min(tb, _round_up(pl.cdiv(B, 2), 8))
    tb = _round_up(tb, 8)
    grid = (pl.cdiv(B, tb),)

    def resident(shape):
        # constant index_map -> same block every grid step -> stays VMEM-resident
        return pl.BlockSpec(shape, lambda i: (0,) * len(shape))

    kernel = functools.partial(gaussian_policy_kernel, act_dim=act_dim)

    out = pl.pallas_call(
        kernel,
        out_shape=jax.ShapeDtypeStruct((B, out_dim), jnp.float32),
        grid=grid,
        in_specs=[
            pl.BlockSpec((tb, obs_dim), lambda i: (i, 0)),
            resident(kp["w1"].shape), resident(kp["b1"].shape),
            resident(kp["w2"].shape), resident(kp["b2"].shape),
            resident(kp["wh"].shape), resident(kp["bh"].shape),
        ],
        out_specs=pl.BlockSpec((tb, out_dim), lambda i: (i, 0)),
        compiler_params=pltpu.CompilerParams(
            dimension_semantics=("parallel",),  # shard batch tiles across v7x's 2 TCs
        ),
    )(obs, kp["w1"], kp["b1"], kp["w2"], kp["b2"], kp["wh"], kp["bh"])

    mean = out[:, :act_dim]
    std = out[:, act_dim:]
    return mean, std


def init_params(key, obs_dim, hidden_sizes, act_dim):
    """Deterministic init mimicking PyTorch Linear default (U[-1/sqrt(fan_in), +]).
    Weights stored transposed as [in, out]; biases as [1, out] (2-D for TPU)."""
    sizes = [obs_dim] + list(hidden_sizes)
    params = {}
    keys = jax.random.split(key, 8)

    def linear(kw, kb, fan_in, fan_out):
        bound = 1.0 / jnp.sqrt(fan_in)
        w = jax.random.uniform(kw, (fan_in, fan_out), jnp.float32, -bound, bound)
        b = jax.random.uniform(kb, (1, fan_out), jnp.float32, -bound, bound)
        return w, b

    params["w1"], params["b1"] = linear(keys[0], keys[1], sizes[0], sizes[1])
    params["w2"], params["b2"] = linear(keys[2], keys[3], sizes[1], sizes[2])
    params["wm"], params["bm"] = linear(keys[4], keys[5], sizes[2], act_dim)
    params["ws"], params["bs"] = linear(keys[6], keys[7], sizes[2], act_dim)
    return params


def reference_forward(obs, p):
    """Pure-JAX fp32 reference with the original GaussianPolicy semantics."""
    h = jnp.maximum(obs @ p["w1"] + p["b1"], 0.0)
    h = jnp.maximum(h @ p["w2"] + p["b2"], 0.0)
    mean = h @ p["wm"] + p["bm"]
    log_std = jnp.clip(h @ p["ws"] + p["bs"], LOG_STD_MIN, LOG_STD_MAX)
    return mean, jnp.exp(log_std)


if __name__ == "__main__":
    key = jax.random.PRNGKey(0)
    k_obs, k_params = jax.random.split(key)

    B, obs_dim, hidden_sizes, act_dim = 8, 16, [32, 32], 8

    obs = jax.random.normal(k_obs, (B, obs_dim), dtype=jnp.float32)
    params = init_params(k_params, obs_dim, hidden_sizes, act_dim)
    kparams = prepare_kernel_params(params, act_dim)

    mean, std = gaussian_policy_forward(obs, kparams)
    mean = jax.block_until_ready(mean)
    std = jax.block_until_ready(std)

    # correctness check against pure-JAX fp32 reference
    # (all-f32 matmuls now; tolerance only covers MXU pass-precision differences)
    mean_ref, std_ref = reference_forward(obs, params)
    assert mean.shape == (B, act_dim) and std.shape == (B, act_dim)
    assert jnp.allclose(mean, mean_ref, atol=1e-2, rtol=1e-2)
    assert jnp.allclose(std, std_ref, atol=1e-2, rtol=1e-2)
    assert bool(jnp.all(std > 0))

    print("KERNEL_OK")
</pallas_src>

<mosaic_0001>
module attributes {stable_mosaic.version = 11 : i64} {
  func.func @gaussian_policy_kernel(%arg0: i32, %arg1: memref<8x16xf32, #tpu.memory_space<vmem>>, %arg2: memref<16x32xf32, #tpu.memory_space<vmem>>, %arg3: memref<1x32xf32, #tpu.memory_space<vmem>>, %arg4: memref<32x32xf32, #tpu.memory_space<vmem>>, %arg5: memref<1x32xf32, #tpu.memory_space<vmem>>, %arg6: memref<32x16xf32, #tpu.memory_space<vmem>>, %arg7: memref<1x16xf32, #tpu.memory_space<vmem>>, %arg8: memref<8x16xf32, #tpu.memory_space<vmem>>) attributes {dimension_semantics = [#tpu.dimension_semantics<parallel>], iteration_bounds = array<i64: 1>, scalar_prefetch = 0 : i64, scratch_operands = 0 : i64, tpu.core_type = #tpu.core_type<tc>, window_params = [{transform_indices = @transform_0, window_bounds = array<i64: 8, 16>}, {pipeline_mode = #tpu.pipeline_mode<synchronous>, transform_indices = @transform_1, window_bounds = array<i64: 16, 32>}, {pipeline_mode = #tpu.pipeline_mode<synchronous>, transform_indices = @transform_2, window_bounds = array<i64: 1, 32>}, {pipeline_mode = #tpu.pipeline_mode<synchronous>, transform_indices = @transform_3, window_bounds = array<i64: 32, 32>}, {pipeline_mode = #tpu.pipeline_mode<synchronous>, transform_indices = @transform_4, window_bounds = array<i64: 1, 32>}, {pipeline_mode = #tpu.pipeline_mode<synchronous>, transform_indices = @transform_5, window_bounds = array<i64: 32, 16>}, {pipeline_mode = #tpu.pipeline_mode<synchronous>, transform_indices = @transform_6, window_bounds = array<i64: 1, 16>}, {transform_indices = @transform_7, window_bounds = array<i64: 8, 16>}]} {
    %c0 = arith.constant 0 : index
    %c0_0 = arith.constant 0 : index
    %0 = vector.load %arg1[%c0, %c0_0] : memref<8x16xf32, #tpu.memory_space<vmem>>, vector<8x16xf32>
    %c0_1 = arith.constant 0 : index
    %c0_2 = arith.constant 0 : index
    %1 = vector.load %arg2[%c0_1, %c0_2] : memref<16x32xf32, #tpu.memory_space<vmem>>, vector<16x32xf32>
    %cst = arith.constant dense<0.000000e+00> : vector<8x32xf32>
    %2 = tpu.matmul %0, %1, %cst {dimension_numbers = #tpu.dot_dimension_numbers<[1], [0], [0], [1], [0, 0, 1, 1], [], []>} : vector<8x16xf32>, vector<16x32xf32>, vector<8x32xf32> -> vector<8x32xf32>
    %c0_3 = arith.constant 0 : index
    %c0_4 = arith.constant 0 : index
    %3 = vector.load %arg3[%c0_3, %c0_4] : memref<1x32xf32, #tpu.memory_space<vmem>>, vector<1x32xf32>
    %4 = vector.broadcast %3 : vector<1x32xf32> to vector<8x32xf32>
    %5 = arith.addf %2, %4 : vector<8x32xf32>
    %cst_5 = arith.constant 0.000000e+00 : f32
    %6 = vector.broadcast %cst_5 : f32 to vector<8x32xf32>
    %7 = arith.maximumf %5, %6 : vector<8x32xf32>
    %c0_6 = arith.constant 0 : index
    %c0_7 = arith.constant 0 : index
    %8 = vector.load %arg4[%c0_6, %c0_7] : memref<32x32xf32, #tpu.memory_space<vmem>>, vector<32x32xf32>
    %cst_8 = arith.constant dense<0.000000e+00> : vector<8x32xf32>
    %9 = tpu.matmul %7, %8, %cst_8 {dimension_numbers = #tpu.dot_dimension_numbers<[1], [0], [0], [1], [0, 0, 1, 1], [], []>} : vector<8x32xf32>, vector<32x32xf32>, vector<8x32xf32> -> vector<8x32xf32>
    %c0_9 = arith.constant 0 : index
    %c0_10 = arith.constant 0 : index
    %10 = vector.load %arg5[%c0_9, %c0_10] : memref<1x32xf32, #tpu.memory_space<vmem>>, vector<1x32xf32>
    %11 = vector.broadcast %10 : vector<1x32xf32> to vector<8x32xf32>
    %12 = arith.addf %9, %11 : vector<8x32xf32>
    %cst_11 = arith.constant 0.000000e+00 : f32
    %13 = vector.broadcast %cst_11 : f32 to vector<8x32xf32>
    %14 = arith.maximumf %12, %13 : vector<8x32xf32>
    %c0_12 = arith.constant 0 : index
    %c0_13 = arith.constant 0 : index
    %15 = vector.load %arg6[%c0_12, %c0_13] : memref<32x16xf32, #tpu.memory_space<vmem>>, vector<32x16xf32>
    %cst_14 = arith.constant dense<0.000000e+00> : vector<8x16xf32>
    %16 = tpu.matmul %14, %15, %cst_14 {dimension_numbers = #tpu.dot_dimension_numbers<[1], [0], [0], [1], [0, 0, 1, 1], [], []>} : vector<8x32xf32>, vector<32x16xf32>, vector<8x16xf32> -> vector<8x16xf32>
    %c0_15 = arith.constant 0 : index
    %c0_16 = arith.constant 0 : index
    %17 = vector.load %arg7[%c0_15, %c0_16] : memref<1x16xf32, #tpu.memory_space<vmem>>, vector<1x16xf32>
    %18 = vector.broadcast %17 : vector<1x16xf32> to vector<8x16xf32>
    %19 = arith.addf %16, %18 : vector<8x16xf32>
    %20 = tpu.iota {dimensions = array<i32: 1>} : vector<1x16xi32>
    %cst_17 = arith.constant -2.000000e+01 : f32
    %cst_18 = arith.constant 2.000000e+00 : f32
    %21 = vector.broadcast %cst_17 : f32 to vector<8x16xf32>
    %22 = arith.maximumf %21, %19 : vector<8x16xf32>
    %23 = vector.broadcast %cst_18 : f32 to vector<8x16xf32>
    %24 = arith.minimumf %23, %22 : vector<8x16xf32>
    %25 = math.exp %24 : vector<8x16xf32>
    %c8_i32 = arith.constant 8 : i32
    %26 = vector.broadcast %c8_i32 : i32 to vector<1x16xi32>
    %27 = arith.cmpi slt, %20, %26 : vector<1x16xi32>
    %28 = vector.shape_cast %27 : vector<1x16xi1> to vector<1x16xi1>
    %29 = vector.broadcast %28 : vector<1x16xi1> to vector<8x16xi1>
    %30 = arith.select %29, %19, %25 : vector<8x16xi1>, vector<8x16xf32>
    %c0_19 = arith.constant 0 : index
    %c0_20 = arith.constant 0 : index
    %31 = vector.load %arg8[%c0_19, %c0_20] : memref<8x16xf32, #tpu.memory_space<vmem>>, vector<8x16xf32>
    tpu.vector_store %arg8[%c0_19, %c0_20], %30 {strides = array<i32>} : memref<8x16xf32, #tpu.memory_space<vmem>>, vector<8x16xf32>,
    return
  }
  func.func @transform_0(%arg0: i32) -> (i32, i32) {
    %c0_i32 = arith.constant 0 : i32
    %c0_i32_0 = arith.constant 0 : i32
    return %arg0, %c0_i32 : i32, i32
  }
  func.func @transform_1(%arg0: i32) -> (i32, i32) {
    %c0_i32 = arith.constant 0 : i32
    %c0_i32_0 = arith.constant 0 : i32
    %c0_i32_1 = arith.constant 0 : i32
    return %c0_i32, %c0_i32_0 : i32, i32
  }
  func.func @transform_2(%arg0: i32) -> (i32, i32) {
    %c0_i32 = arith.constant 0 : i32
    %c0_i32_0 = arith.constant 0 : i32
    %c0_i32_1 = arith.constant 0 : i32
    return %c0_i32, %c0_i32_0 : i32, i32
  }
  func.func @transform_3(%arg0: i32) -> (i32, i32) {
    %c0_i32 = arith.constant 0 : i32
    %c0_i32_0 = arith.constant 0 : i32
    %c0_i32_1 = arith.constant 0 : i32
    return %c0_i32, %c0_i32_0 : i32, i32
  }
  func.func @transform_4(%arg0: i32) -> (i32, i32) {
    %c0_i32 = arith.constant 0 : i32
    %c0_i32_0 = arith.constant 0 : i32
    %c0_i32_1 = arith.constant 0 : i32
    return %c0_i32, %c0_i32_0 : i32, i32
  }
  func.func @transform_5(%arg0: i32) -> (i32, i32) {
    %c0_i32 = arith.constant 0 : i32
    %c0_i32_0 = arith.constant 0 : i32
    %c0_i32_1 = arith.constant 0 : i32
    return %c0_i32, %c0_i32_0 : i32, i32
  }
  func.func @transform_6(%arg0: i32) -> (i32, i32) {
    %c0_i32 = arith.constant 0 : i32
    %c0_i32_0 = arith.constant 0 : i32
    %c0_i32_1 = arith.constant 0 : i32
    return %c0_i32, %c0_i32_0 : i32, i32
  }
  func.func @transform_7(%arg0: i32) -> (i32, i32) {
    %c0_i32 = arith.constant 0 : i32
    %c0_i32_0 = arith.constant 0 : i32
    return %arg0, %c0_i32 : i32, i32
  }
}

</mosaic_0001>

<llo_original>
// kernel: tpu_custom_call.1
$region0: #{tpu_custom_call.1}
  #allocation0 [shape = 'u32[]', space=smem, size = 0x4, offset = 0x4, fixed_abs, tag = 'smem constant byte address 0x4 - core index']
  #allocation1 [shape = 'u32[144,128]{1,0:T(1,128)}', space=vmem, size = 0x12000, scoped, tag = 'internal scratch']
  %s0 = inlined_call_operand.hbm [shape: f32[8,16], index: 0, kind: input, shape index: {}]
  %s1 = inlined_call_operand.vmem [shape: f32[16,32], index: 1, kind: input, shape index: {}]
  %s2 = inlined_call_operand.vmem [shape: f32[1,32], index: 2, kind: input, shape index: {}]
  %s3 = inlined_call_operand.vmem [shape: f32[32,32], index: 3, kind: input, shape index: {}]
  %s4 = inlined_call_operand.vmem [shape: f32[1,32], index: 4, kind: input, shape index: {}]
  %s5 = inlined_call_operand.vmem [shape: f32[32,16], index: 5, kind: input, shape index: {}]
  %s6 = inlined_call_operand.vmem [shape: f32[1,16], index: 6, kind: input, shape index: {}]
  %s7 = inlined_call_operand.hbm [shape: f32[8,16], index: 7, kind: output, shape index: {}]
  %s8 = sld [smem:[#allocation0]]
  $region42: #{tpu_custom_call.1} parent=0
    _
  %s10 = ssub.s32 1, %s8
  %s11 = scalar_select 0, %s10, %s8
  $region1: #{tpu_custom_call.1} parent=0
    #allocation2 [shape = 'u8[4096]{0}', space=vmem, size = 0x1000, scoped, tag = 'input window, operand 0, single buffered']
    #allocation3 [shape = 's32[1]{0}', space=sflag, size = 0x4, scoped, tag = 'scoped memory for tpu_custom_call.1']
    #allocation4 [shape = 's32[1]{0}', space=sflag, size = 0x4, scoped, tag = 'scoped memory for tpu_custom_call.1']
    #allocation5 [shape = 'u8[4096]{0}', space=vmem, size = 0x1000, scoped, tag = 'output window, operand 0, single buffered']
    %12 = vsyncpa [#allocation3], 0
    %13 = vsyncpa [#allocation4], 0
    // Predicated region
    $region2: #{tpu_custom_call.1} parent=1 // pred_check
      _
    $region3: #{tpu_custom_call.1} parent=1 // pred_check_branch
      %15 = sbr.rel (0) target = $region5
    $region4: #{tpu_custom_call.1} parent=1 // pred_region
      %s17 = ssub.s32 128, 128
      %18 = vsyncadd [#allocation3], %s17
      %s20 = sshll.u32 [#allocation2], 4
      %s21 = int_to_ptr.vmem [resolvable:$true] %s20
      %23 = dma.hbm_to_vmem [thread:$0]  %s0, 128, %s21, [#allocation3]
    $region5: #{tpu_custom_call.1} parent=1 // pred_fallthru
      _
    // Predicated region
    $region6: #{tpu_custom_call.1} parent=1 // pred_check
      _
    $region7: #{tpu_custom_call.1} parent=1 // pred_check_branch
      %25 = sbr.rel (0) target = $region9
    $region8: #{tpu_custom_call.1} parent=1 // pred_region
      _
    $region9: #{tpu_custom_call.1} parent=1 // pred_fallthru
      _
    // Predicated region
    $region10: #{tpu_custom_call.1} parent=1 // pred_check
      _
    $region11: #{tpu_custom_call.1} parent=1 // pred_check_branch
      %27 = sbr.rel (0) target = $region13
    $region12: #{tpu_custom_call.1} parent=1 // pred_region
      _
    $region13: #{tpu_custom_call.1} parent=1 // pred_fallthru
      _
    // Predicated region
    $region14: #{tpu_custom_call.1} parent=1 // pred_check
      _
    $region15: #{tpu_custom_call.1} parent=1 // pred_check_branch
      %29 = sbr.rel (0) target = $region17
    $region16: #{tpu_custom_call.1} parent=1 // pred_region
      _
    $region17: #{tpu_custom_call.1} parent=1 // pred_fallthru
      _
    // Predicated region
    $region18: #{tpu_custom_call.1} parent=1 // pred_check
      _
    $region19: #{tpu_custom_call.1} parent=1 // pred_check_branch
      %31 = sbr.rel (0) target = $region21
    $region20: #{tpu_custom_call.1} parent=1 // pred_region
      _
    $region21: #{tpu_custom_call.1} parent=1 // pred_fallthru
      _
    // Predicated region
    $region22: #{tpu_custom_call.1} parent=1 // pred_check
      _
    $region23: #{tpu_custom_call.1} parent=1 // pred_check_branch
      %33 = sbr.rel (0) target = $region25
    $region24: #{tpu_custom_call.1} parent=1 // pred_region
      _
    $region25: #{tpu_custom_call.1} parent=1 // pred_fallthru
      _
    // Predicated region
    $region26: #{tpu_custom_call.1} parent=1 // pred_check
      _
    $region27: #{tpu_custom_call.1} parent=1 // pred_check_branch
      %35 = sbr.rel (0) target = $region29
    $region28: #{tpu_custom_call.1} parent=1 // pred_region
      _
    $region29: #{tpu_custom_call.1} parent=1 // pred_fallthru
      _
    // Predicated region
    $region30: #{tpu_custom_call.1} parent=1 // pred_check
      _
    $region31: #{tpu_custom_call.1} parent=1 // pred_check_branch
      %37 = sbr.rel (0) target = $region33
    $region32: #{tpu_custom_call.1} parent=1 // pred_region
      %38 = dma.done [#allocation3], 128
    $region33: #{tpu_custom_call.1} parent=1 // pred_fallthru
      _
    %v39 = vld [vmem:[#allocation2] sm:$0xff]
    %v40 = vld [vmem:[%s1] sm:$0xff]
    %v41 = vld [vmem:[%s1 + $0x8] sm:$0xff]
    %v42 = vld [vmem:[%s2] sm:$0x1]
    %v44 = vlaneseq
    %v45 = vshrl.u32 %v44, 7
    %v46 = vsub.s32 0, %v45
    %v47 = vrot.slane %v42, %v46
    %vm49 = vcmask 130048
    %v51 = vsel %vm49, %v39, 0
    %53 = vmatprep.subr.mxu0 0.0
    %54 = vmatpush1.msra.mxu0 %v40
    %55 = vmatprep.subr.mxu0 0.0
    %56 = vmatpush1.msra.mxu0 %v41
    %57 = vmatprep.subr.mxu0 0.0
    %58 = vmatpush1.msra.mxu0 0.0
    %59 = vmatprep.subr.mxu0 0.0
    %60 = vmatpush1.msra.mxu0 0.0
    %61 = vmatprep.subr.mxu0 0.0
    %62 = vmatpush1.msra.mxu0 0.0
    %63 = vmatprep.subr.mxu0 0.0
    %64 = vmatpush1.msra.mxu0 0.0
    %65 = vmatprep.subr.mxu0 0.0
    %66 = vmatpush1.msra.mxu0 0.0
    %67 = vmatprep.subr.mxu0 0.0
    %68 = vmatpush1.msra.mxu0 0.0
    %69 = vmatprep.subr.mxu0 0.0
    %70 = vmatpush1.msra.mxu0 0.0
    %71 = vmatprep.subr.mxu0 0.0
    %72 = vmatpush1.msra.mxu0 0.0
    %73 = vmatprep.subr.mxu0 0.0
    %74 = vmatpush1.msra.mxu0 0.0
    %75 = vmatprep.subr.mxu0 0.0
    %76 = vmatpush1.msra.mxu0 0.0
    %77 = vmatprep.subr.mxu0 0.0
    %78 = vmatpush1.msra.mxu0 0.0
    %79 = vmatprep.subr.mxu0 0.0
    %80 = vmatpush1.msra.mxu0 0.0
    %81 = vmatprep.subr.mxu0 0.0
    %82 = vmatpush1.msra.mxu0 0.0
    %83 = vmatprep.subr.mxu0 0.0
    %84 = vmatpush1.msra.mxu0 0.0
    %85 = vmatprep.subr.mxu0 0.0
    %86 = vmatpush1.msra.mxu0 0.0
    %87 = vmatprep.subr.mxu0 0.0
    %88 = vmatpush1.msra.mxu0 0.0
    %89 = vmatprep.subr.mxu0 0.0
    %90 = vmatpush1.msra.mxu0 0.0
    %91 = vmatprep.subr.mxu0 0.0
    %92 = vmatpush1.msra.mxu0 0.0
    %93 = vmatprep.subr.mxu0 0.0
    %94 = vmatpush1.msra.mxu0 0.0
    %95 = vmatprep.subr.mxu0 0.0
    %96 = vmatpush1.msra.mxu0 0.0
    %97 = vmatprep.subr.mxu0 0.0
    %98 = vmatpush1.msra.mxu0 0.0
    %99 = vmatprep.subr.mxu0 0.0
    %100 = vmatpush1.msra.mxu0 0.0
    %101 = vmatprep.subr.mxu0 0.0
    %102 = vmatpush1.msra.mxu0 0.0
    %103 = vmatprep.subr.mxu0 0.0
    %104 = vmatpush1.msra.mxu0 0.0
    %105 = vmatprep.subr.mxu0 0.0
    %106 = vmatpush1.msra.mxu0 0.0
    %107 = vmatprep.subr.mxu0 0.0
    %108 = vmatpush1.msra.mxu0 0.0
    %109 = vmatprep.subr.mxu0 0.0
    %110 = vmatpush1.msra.mxu0 0.0
    %111 = vmatprep.subr.mxu0 0.0
    %112 = vmatpush1.msra.mxu0 0.0
    %113 = vmatprep.subr.mxu0 0.0
    %114 = vmatpush1.msra.mxu0 0.0
    %115 = vmatprep.subr.mxu0 0.0
    %116 = vmatpush1.msra.mxu0 0.0
    %117 = vmatprep.mubr.f32.mxu0 0.0
    %118 = vmatmul.mubr.f32.gmra.mrb[0].mxu0 %v51
    %v119 = vpop.f32.mrb[0].mxu0
    %v120 = vadd.f32 %v47, %v119
    %v121 = vpop.f32.mrb[0].mxu0
    %122 = vdwg.mxu0
    %v123 = vmax.f32 %v120, 0.0
    %v124 = vld [vmem:[%s3] sm:$0xff]
    %v125 = vld [vmem:[%s3 + $0x8] sm:$0xff]
    %v126 = vld [vmem:[%s3 + $0x10] sm:$0xff]
    %v127 = vld [vmem:[%s3 + $0x18] sm:$0xff]
    %v128 = vld [vmem:[%s4] sm:$0x1]
    %v130 = vlaneseq
    %v131 = vshrl.u32 %v130, 7
    %v132 = vsub.s32 0, %v131
    %v133 = vrot.slane %v128, %v132
    %vm135 = vcmask 261120
    %v137 = vsel %vm135, %v123, 0
    %139 = vmatprep.subr.mxu0 0.0
    %140 = vmatpush1.msra.mxu0 %v124
    %141 = vmatprep.subr.mxu0 0.0
    %142 = vmatpush1.msra.mxu0 %v125
    %143 = vmatprep.subr.mxu0 0.0
    %144 = vmatpush1.msra.mxu0 %v126
    %145 = vmatprep.subr.mxu0 0.0
    %146 = vmatpush1.msra.mxu0 %v127
    %147 = vmatprep.subr.mxu0 0.0
    %148 = vmatpush1.msra.mxu0 0.0
    %149 = vmatprep.subr.mxu0 0.0
    %150 = vmatpush1.msra.mxu0 0.0
    %151 = vmatprep.subr.mxu0 0.0
    %152 = vmatpush1.msra.mxu0 0.0
    %153 = vmatprep.subr.mxu0 0.0
    %154 = vmatpush1.msra.mxu0 0.0
    %155 = vmatprep.subr.mxu0 0.0
    %156 = vmatpush1.msra.mxu0 0.0
    %157 = vmatprep.subr.mxu0 0.0
    %158 = vmatpush1.msra.mxu0 0.0
    %159 = vmatprep.subr.mxu0 0.0
    %160 = vmatpush1.msra.mxu0 0.0
    %161 = vmatprep.subr.mxu0 0.0
    %162 = vmatpush1.msra.mxu0 0.0
    %163 = vmatprep.subr.mxu0 0.0
    %164 = vmatpush1.msra.mxu0 0.0
    %165 = vmatprep.subr.mxu0 0.0
    %166 = vmatpush1.msra.mxu0 0.0
    %167 = vmatprep.subr.mxu0 0.0
    %168 = vmatpush1.msra.mxu0 0.0
    %169 = vmatprep.subr.mxu0 0.0
    %170 = vmatpush1.msra.mxu0 0.0
    %171 = vmatprep.subr.mxu0 0.0
    %172 = vmatpush1.msra.mxu0 0.0
    %173 = vmatprep.subr.mxu0 0.0
    %174 = vmatpush1.msra.mxu0 0.0
    %175 = vmatprep.subr.mxu0 0.0
    %176 = vmatpush1.msra.mxu0 0.0
    %177 = vmatprep.subr.mxu0 0.0
    %178 = vmatpush1.msra.mxu0 0.0
    %179 = vmatprep.subr.mxu0 0.0
    %180 = vmatpush1.msra.mxu0 0.0
    %181 = vmatprep.subr.mxu0 0.0
    %182 = vmatpush1.msra.mxu0 0.0
    %183 = vmatprep.subr.mxu0 0.0
    %184 = vmatpush1.msra.mxu0 0.0
    %185 = vmatprep.subr.mxu0 0.0
    %186 = vmatpush1.msra.mxu0 0.0
    %187 = vmatprep.subr.mxu0 0.0
    %188 = vmatpush1.msra.mxu0 0.0
    %189 = vmatprep.subr.mxu0 0.0
    %190 = vmatpush1.msra.mxu0 0.0
    %191 = vmatprep.subr.mxu0 0.0
    %192 = vmatpush1.msra.mxu0 0.0
    %193 = vmatprep.subr.mxu0 0.0
    %194 = vmatpush1.msra.mxu0 0.0
    %195 = vmatprep.subr.mxu0 0.0
    %196 = vmatpush1.msra.mxu0 0.0
    %197 = vmatprep.subr.mxu0 0.0
    %198 = vmatpush1.msra.mxu0 0.0
    %199 = vmatprep.subr.mxu0 0.0
    %200 = vmatpush1.msra.mxu0 0.0
    %201 = vmatprep.subr.mxu0 0.0
    %202 = vmatpush1.msra.mxu0 0.0
    %203 = vmatprep.mubr.f32.mxu0 0.0
    %204 = vmatmul.mubr.f32.gmra.mrb[0].mxu0 %v137
    %v205 = vpop.f32.mrb[0].mxu0
    %v206 = vadd.f32 %v133, %v205
    %v207 = vpop.f32.mrb[0].mxu0
    %208 = vdwg.mxu0
    %v209 = vmax.f32 %v206, 0.0
    %v210 = vld [vmem:[%s5] sm:$0xff]
    %v211 = vld [vmem:[%s5 + $0x8] sm:$0xff]
    %v212 = vld [vmem:[%s5 + $0x10] sm:$0xff]
    %v213 = vld [vmem:[%s5 + $0x18] sm:$0xff]
    %v214 = vld [vmem:[%s6] sm:$0x1]
    %v216 = vlaneseq
    %v217 = vshrl.u32 %v216, 7
    %v218 = vsub.s32 0, %v217
    %v219 = vrot.slane %v214, %v218
    %v222 = vsel %vm135, %v209, 0
    %224 = vmatprep.subr.mxu0 0.0
    %225 = vmatpush1.msra.mxu0 %v210
    %226 = vmatprep.subr.mxu0 0.0
    %227 = vmatpush1.msra.mxu0 %v211
    %228 = vmatprep.subr.mxu0 0.0
    %229 = vmatpush1.msra.mxu0 %v212
    %230 = vmatprep.subr.mxu0 0.0
    %231 = vmatpush1.msra.mxu0 %v213
    %232 = vmatprep.subr.mxu0 0.0
    %233 = vmatpush1.msra.mxu0 0.0
    %234 = vmatprep.subr.mxu0 0.0
    %235 = vmatpush1.msra.mxu0 0.0
    %236 = vmatprep.subr.mxu0 0.0
    %237 = vmatpush1.msra.mxu0 0.0
    %238 = vmatprep.subr.mxu0 0.0
    %239 = vmatpush1.msra.mxu0 0.0
    %240 = vmatprep.subr.mxu0 0.0
    %241 = vmatpush1.msra.mxu0 0.0
    %242 = vmatprep.subr.mxu0 0.0
    %243 = vmatpush1.msra.mxu0 0.0
    %244 = vmatprep.subr.mxu0 0.0
    %245 = vmatpush1.msra.mxu0 0.0
    %246 = vmatprep.subr.mxu0 0.0
    %247 = vmatpush1.msra.mxu0 0.0
    %248 = vmatprep.subr.mxu0 0.0
    %249 = vmatpush1.msra.mxu0 0.0
    %250 = vmatprep.subr.mxu0 0.0
    %251 = vmatpush1.msra.mxu0 0.0
    %252 = vmatprep.subr.mxu0 0.0
    %253 = vmatpush1.msra.mxu0 0.0
    %254 = vmatprep.subr.mxu0 0.0
    %255 = vmatpush1.msra.mxu0 0.0
    %256 = vmatprep.subr.mxu0 0.0
    %257 = vmatpush1.msra.mxu0 0.0
    %258 = vmatprep.subr.mxu0 0.0
    %259 = vmatpush1.msra.mxu0 0.0
    %260 = vmatprep.subr.mxu0 0.0
    %261 = vmatpush1.msra.mxu0 0.0
    %262 = vmatprep.subr.mxu0 0.0
    %263 = vmatpush1.msra.mxu0 0.0
    %264 = vmatprep.subr.mxu0 0.0
    %265 = vmatpush1.msra.mxu0 0.0
    %266 = vmatprep.subr.mxu0 0.0
    %267 = vmatpush1.msra.mxu0 0.0
    %268 = vmatprep.subr.mxu0 0.0
    %269 = vmatpush1.msra.mxu0 0.0
    %270 = vmatprep.subr.mxu0 0.0
    %271 = vmatpush1.msra.mxu0 0.0
    %272 = vmatprep.subr.mxu0 0.0
    %273 = vmatpush1.msra.mxu0 0.0
    %274 = vmatprep.subr.mxu0 0.0
    %275 = vmatpush1.msra.mxu0 0.0
    %276 = vmatprep.subr.mxu0 0.0
    %277 = vmatpush1.msra.mxu0 0.0
    %278 = vmatprep.subr.mxu0 0.0
    %279 = vmatpush1.msra.mxu0 0.0
    %280 = vmatprep.subr.mxu0 0.0
    %281 = vmatpush1.msra.mxu0 0.0
    %282 = vmatprep.subr.mxu0 0.0
    %283 = vmatpush1.msra.mxu0 0.0
    %284 = vmatprep.subr.mxu0 0.0
    %285 = vmatpush1.msra.mxu0 0.0
    %286 = vmatprep.subr.mxu0 0.0
    %287 = vmatpush1.msra.mxu0 0.0
    %288 = vmatprep.mubr.f32.mxu0 0.0
    %289 = vmatmul.mubr.f32.gmra.mrb[0].mxu0 %v222
    %v290 = vpop.f32.mrb[0].mxu0
    %v291 = vadd.f32 %v219, %v290
    %v292 = vpop.f32.mrb[0].mxu0
    %293 = vdwg.mxu0
    %v294 = vlaneseq
    %v295 = vand.u32 %v294, 127
    %v296 = vmax.f32 %v291, -20.0
    %v297 = vmin.f32 %v296, 2.0
    %v298 = vmul.f32 %v297, 1.442695
    %v299 = vpow.pop %v298
    %vm300 = vcmp.lt.s32.totalorder %v295, 8
    %v301 = vsel %vm300, 1, 0
    %vm302 = vcmp.eq.s32.totalorder %v301, 1
    %v303 = vsel %vm302, %v291, %v299
    %304 = vst.msk [vmem:[#allocation5] sm:$0xff] %vm49, %v303
    // Predicated region
    $region34: #{tpu_custom_call.1} parent=1 // pred_check
      _
    $region35: #{tpu_custom_call.1} parent=1 // pred_check_branch
      %306 = sbr.rel (0) target = $region37
    $region36: #{tpu_custom_call.1} parent=1 // pred_region
      %s308 = ssub.s32 128, 128
      %309 = vsyncadd [#allocation4], %s308
      %s311 = sshll.u32 [#allocation5], 4
      %s312 = int_to_ptr.vmem [resolvable:$true] %s311
      %314 = dma.vmem_to_hbm [thread:$0]  %s312, 128, %s7, [#allocation4]
    $region37: #{tpu_custom_call.1} parent=1 // pred_fallthru
      _
    // Predicated region
    $region38: #{tpu_custom_call.1} parent=1 // pred_check
      _
    $region39: #{tpu_custom_call.1} parent=1 // pred_check_branch
      %316 = sbr.rel (0) target = $region41
    $region40: #{tpu_custom_call.1} parent=1 // pred_region
      %317 = dma.done [#allocation4], 128
    $region41: #{tpu_custom_call.1} parent=1 // pred_fallthru
      _
    %318 = vsyncpa [#allocation3], 1
    %319 = vsyncpa [#allocation4], 1

</llo_original>
